<compile_context>
chip_gen: v7x
topology: tpu7x:2x2x1
jax: 0.10.0
libtpu: 0.0.40
codegen_flags: <defaults>
</compile_context>

<pallas_src>
import jax
import jax.numpy as jnp
from jax.experimental import pallas as pl
from jax.experimental.pallas import tpu as pltpu


def _round_up(a, b):
    return (a + b - 1) // b * b


def _sublane_multiple(dtype):
    return {4: 8, 2: 16, 1: 32}.get(jnp.dtype(dtype).itemsize, 8)


# --------------------------------- kernels ---------------------------------

def _ffn_kernel_single_h(x_ref, w1_ref, b1_ref, w2_ref, b2_ref, o_ref):
    """Whole hidden dim resident in VMEM: one fused pass, no accumulator."""
    x = x_ref[...]                                                  # native dtype (MXU fast path)
    h = jnp.dot(x, w1_ref[...], preferred_element_type=jnp.float32)
    h = jnp.maximum(h + b1_ref[...], 0.0)                           # bias + ReLU in f32
    h = h.astype(x.dtype)                                           # native operands for 2nd matmul
    y = jnp.dot(h, w2_ref[...], preferred_element_type=jnp.float32) + b2_ref[...]
    o_ref[...] = y.astype(o_ref.dtype)


def _ffn_kernel_multi_h(x_ref, w1_ref, b1_ref, w2_ref, b2_ref, o_ref, acc_ref):
    """Hidden dim tiled on grid axis 1: accumulate partial W2 products in f32 VMEM."""
    h_idx = pl.program_id(1)

    @pl.when(h_idx == 0)
    def _():
        acc_ref[...] = jnp.zeros_like(acc_ref)

    x = x_ref[...]
    h = jnp.dot(x, w1_ref[...], preferred_element_type=jnp.float32)
    h = jnp.maximum(h + b1_ref[...], 0.0)
    h = h.astype(x.dtype)
    acc_ref[...] += jnp.dot(h, w2_ref[...], preferred_element_type=jnp.float32)

    @pl.when(h_idx == pl.num_programs(1) - 1)
    def _():
        o_ref[...] = (acc_ref[...] + b2_ref[...]).astype(o_ref.dtype)


# --------------------------------- wrapper ---------------------------------

def feed_forward_pallas(x, w1, b1, w2, b2, *, tm=2048, th=512, compute_dtype=None):
    """x: (..., E) -> (..., E)

    w1: (E, H)  b1: (H,)   (i.e. torch W1.weight.T / W1.bias)
    w2: (H, E)  b2: (E,)
    compute_dtype: optional MXU operand dtype (e.g. jnp.bfloat16 on v6e/v7x);
                   accumulation/bias/ReLU stay f32, output keeps x.dtype.
    """
    orig_shape = x.shape
    E = orig_shape[-1]
    H = w1.shape[1]
    assert w1.shape == (E, H) and w2.shape == (H, E)
    assert b1.shape == (H,) and b2.shape == (E,)

    out_dtype = x.dtype
    if compute_dtype is not None:
        x = x.astype(compute_dtype)
        w1 = w1.astype(compute_dtype)
        w2 = w2.astype(compute_dtype)
    act_dtype = x.dtype

    x2 = x.reshape(-1, E)
    M = x2.shape[0]

    LANE = 128
    SUB = _sublane_multiple(act_dtype)

    # ---- hidden-dim tiling (reduction grid axis; single step for small H) ----
    th = max(LANE, _round_up(th, LANE))
    Hp = _round_up(H, LANE)
    if Hp <= th:
        th_eff = Hp                      # whole (padded) H resident -> single step
    else:
        th_eff = th
        Hp = _round_up(H, th_eff)        # keep th_eff | Hp (zero pads are exact no-ops)
    nh = Hp // th_eff

    # ---- token tiling: big tiles, ragged last block, >=2 parallel steps ----
    if M <= SUB:
        tm_eff = M                       # full-dim block, legal for any M
    else:
        tm_eff = min(_round_up(tm, SUB), _round_up(M, SUB))
        # >=2 token tiles so both v7x TensorCores get work (harmless on 1-TC chips).
        tm_eff = max(SUB, min(tm_eff, _round_up(pl.cdiv(M, 2), SUB)))

    # ---- generation-aware VMEM cap + accounting (incl. hidden intermediate) ----
    act_item = jnp.dtype(act_dtype).itemsize
    w_item = jnp.dtype(w1.dtype).itemsize
    try:
        vmem_cap = int(pltpu.get_tpu_info().vmem_capacity_bytes)
    except Exception:
        vmem_cap = 64 << 20              # conservative fallback (v7x per-TC size)
    vmem_limit = max(16 << 20, (vmem_cap * 3) // 4)   # ~48 MiB v7x, ~96 MiB v5e/v6e

    def vmem_need(tm_):
        Er = _round_up(E, LANE)          # lane padding applied by the VMEM layout
        Es = _round_up(E, SUB)
        nbuf_w = 1 if nh == 1 else 2     # weights single-buffered when resident
        need = 2 * tm_ * Er * act_item             # x tile (double-buffered)
        need += 2 * tm_ * Er * act_item            # out tile (double-buffered)
        need += nbuf_w * Es * th_eff * w_item      # W1 tile(s)
        need += nbuf_w * th_eff * Er * w_item      # W2 tile(s)
        need += nbuf_w * th_eff * 4 + Er * 4       # biases (f32)
        need += tm_ * th_eff * (4 + act_item)      # hidden f32 + native-dtype cast copy
        if nh > 1:
            need += tm_ * Er * 4                   # f32 accumulator scratch
        return need

    while tm_eff > SUB and vmem_need(tm_eff) > (vmem_limit * 4) // 5:
        tm_eff = max(SUB, _round_up(tm_eff // 2, SUB))

    grid = (pl.cdiv(M, tm_eff), nh)

    # ---- weight/bias padding along H only (tiny, one-time, exact no-op math) ----
    w1p = jnp.pad(w1, ((0, 0), (0, Hp - H)))
    w2p = jnp.pad(w2, ((0, Hp - H), (0, 0)))
    b1p = jnp.pad(b1, (0, Hp - H)).astype(jnp.float32).reshape(1, Hp)
    b2p = b2.astype(jnp.float32).reshape(1, E)

    if nh == 1:
        kernel = _ffn_kernel_single_h
        scratch = []
    else:
        kernel = _ffn_kernel_multi_h
        scratch = [pltpu.VMEM((tm_eff, E), jnp.float32)]

    def build(use_buffered):
        def spec(shape, index_map, resident):
            if use_buffered and resident:
                return pl.BlockSpec(shape, index_map, pipeline_mode=pl.Buffered(1))
            return pl.BlockSpec(shape, index_map)

        w_resident = (nh == 1)           # constant index_map only when single H step
        in_specs = [
            pl.BlockSpec((tm_eff, E), lambda i, h: (i, 0)),          # x tile (native E)
            spec((E, th_eff), lambda i, h: (0, h), w_resident),      # W1
            spec((1, th_eff), lambda i, h: (0, h), w_resident),      # b1
            spec((th_eff, E), lambda i, h: (h, 0), w_resident),      # W2
            spec((1, E), lambda i, h: (0, 0), True),                 # b2 (always resident)
        ]
        return pl.pallas_call(
            kernel,
            out_shape=jax.ShapeDtypeStruct((M, E), out_dtype),
            grid_spec=pltpu.PrefetchScalarGridSpec(
                num_scalar_prefetch=0,
                grid=grid,
                in_specs=in_specs,
                out_specs=pl.BlockSpec((tm_eff, E), lambda i, h: (i, 0)),
                scratch_shapes=scratch,
            ),
            compiler_params=pltpu.CompilerParams(
                dimension_semantics=("parallel", "arbitrary"),
                vmem_limit_bytes=int(vmem_limit)),
        )

    if hasattr(pl, "Buffered"):
        try:
            out = jax.block_until_ready(build(True)(x2, w1p, b1p, w2p, b2p))
        except Exception:
            out = build(False)(x2, w1p, b1p, w2p, b2p)
    else:
        out = build(False)(x2, w1p, b1p, w2p, b2p)

    return out.reshape(orig_shape)


def _reference(x, w1, b1, w2, b2):
    h = jnp.maximum(x @ w1 + b1, 0.0)
    return h @ w2 + b2


if __name__ == "__main__":
    # model_params: embedding_dim=32, ff_hidden_dim=64
    E, H = 32, 64
    B, S = 2, 8                       # input1: (batch, seq, embedding_dim)

    key = jax.random.PRNGKey(0)
    kx, k1, k2, k3, k4, kx2, k5, k6, k7, k8, kx3 = jax.random.split(key, 11)

    # Deterministic param init mimicking torch nn.Linear default
    # (uniform in [-1/sqrt(fan_in), 1/sqrt(fan_in)]).
    lim1 = 1.0 / (E ** 0.5)
    lim2 = 1.0 / (H ** 0.5)
    w1 = jax.random.uniform(k1, (E, H), jnp.float32, -lim1, lim1)   # = torch W1.weight.T
    b1 = jax.random.uniform(k2, (H,),   jnp.float32, -lim1, lim1)
    w2 = jax.random.uniform(k3, (H, E), jnp.float32, -lim2, lim2)   # = torch W2.weight.T
    b2 = jax.random.uniform(k4, (E,),   jnp.float32, -lim2, lim2)

    # Small case from the module spec (single H tile, resident weights).
    x = jax.random.normal(kx, (B, S, E), jnp.float32)
    out = jax.block_until_ready(feed_forward_pallas(x, w1, b1, w2, b2))
    ref = _reference(x.reshape(-1, E), w1, b1, w2, b2).reshape(B, S, E)
    assert out.shape == (B, S, E)
    assert jnp.allclose(out, ref, atol=1e-5, rtol=1e-5), "mismatch vs reference (small)"

    # Larger, non-tile-divisible token count: ragged last token block + 2 parallel tiles.
    x_big = jax.random.normal(kx2, (4, 300, E), jnp.float32)
    out_big = jax.block_until_ready(feed_forward_pallas(x_big, w1, b1, w2, b2))
    ref_big = _reference(x_big.reshape(-1, E), w1, b1, w2, b2).reshape(4, 300, E)
    assert out_big.shape == (4, 300, E)
    assert jnp.allclose(out_big, ref_big, atol=1e-5, rtol=1e-5), "mismatch vs reference (big)"

    # Multi-H-tile path (H reduction grid axis + f32 VMEM accumulator).
    H2 = 320
    lim1b = 1.0 / (E ** 0.5)
    lim2b = 1.0 / (H2 ** 0.5)
    w1b = jax.random.uniform(k5, (E, H2), jnp.float32, -lim1b, lim1b)
    b1b = jax.random.uniform(k6, (H2,),   jnp.float32, -lim1b, lim1b)
    w2b = jax.random.uniform(k7, (H2, E), jnp.float32, -lim2b, lim2b)
    b2b = jax.random.uniform(k8, (E,),    jnp.float32, -lim2b, lim2b)
    x_h = jax.random.normal(kx3, (3, 40, E), jnp.float32)
    out_h = jax.block_until_ready(feed_forward_pallas(x_h, w1b, b1b, w2b, b2b, th=128))
    ref_h = _reference(x_h.reshape(-1, E), w1b, b1b, w2b, b2b).reshape(3, 40, E)
    assert out_h.shape == (3, 40, E)
    assert jnp.allclose(out_h, ref_h, atol=5e-5, rtol=5e-5), "mismatch vs reference (multi-H)"

    print("KERNEL_OK")
</pallas_src>

<mosaic_0001>
module attributes {stable_mosaic.version = 11 : i64} {
  func.func @_ffn_kernel_single_h(%arg0: i32, %arg1: i32, %arg2: memref<8x32xf32, #tpu.memory_space<vmem>>, %arg3: memref<32x128xf32, #tpu.memory_space<vmem>>, %arg4: memref<1x128xf32, #tpu.memory_space<vmem>>, %arg5: memref<128x32xf32, #tpu.memory_space<vmem>>, %arg6: memref<1x32xf32, #tpu.memory_space<vmem>>, %arg7: memref<8x32xf32, #tpu.memory_space<vmem>>) attributes {dimension_semantics = [#tpu.dimension_semantics<parallel>, #tpu.dimension_semantics<arbitrary>], iteration_bounds = array<i64: 2, 1>, scalar_prefetch = 0 : i64, scratch_operands = 0 : i64, tpu.core_type = #tpu.core_type<tc>, window_params = [{transform_indices = @transform_0, window_bounds = array<i64: 8, 32>}, {pipeline_mode = #tpu.pipeline_mode<synchronous>, transform_indices = @transform_1, window_bounds = array<i64: 32, 128>}, {pipeline_mode = #tpu.pipeline_mode<synchronous>, transform_indices = @transform_2, window_bounds = array<i64: 1, 128>}, {pipeline_mode = #tpu.pipeline_mode<synchronous>, transform_indices = @transform_3, window_bounds = array<i64: 128, 32>}, {pipeline_mode = #tpu.pipeline_mode<synchronous>, transform_indices = @transform_4, window_bounds = array<i64: 1, 32>}, {transform_indices = @transform_5, window_bounds = array<i64: 8, 32>}]} {
    %c0 = arith.constant 0 : index
    %c0_0 = arith.constant 0 : index
    %0 = vector.load %arg2[%c0, %c0_0] : memref<8x32xf32, #tpu.memory_space<vmem>>, vector<8x32xf32>
    %c0_1 = arith.constant 0 : index
    %c0_2 = arith.constant 0 : index
    %1 = vector.load %arg3[%c0_1, %c0_2] : memref<32x128xf32, #tpu.memory_space<vmem>>, vector<32x128xf32>
    %cst = arith.constant dense<0.000000e+00> : vector<8x128xf32>
    %2 = tpu.matmul %0, %1, %cst {dimension_numbers = #tpu.dot_dimension_numbers<[1], [0], [0], [1], [0, 0, 1, 1], [], []>} : vector<8x32xf32>, vector<32x128xf32>, vector<8x128xf32> -> vector<8x128xf32>
    %c0_3 = arith.constant 0 : index
    %c0_4 = arith.constant 0 : index
    %3 = vector.load %arg4[%c0_3, %c0_4] : memref<1x128xf32, #tpu.memory_space<vmem>>, vector<1x128xf32>
    %4 = vector.broadcast %3 : vector<1x128xf32> to vector<8x128xf32>
    %5 = arith.addf %2, %4 : vector<8x128xf32>
    %cst_5 = arith.constant 0.000000e+00 : f32
    %6 = vector.broadcast %cst_5 : f32 to vector<8x128xf32>
    %7 = arith.maximumf %5, %6 : vector<8x128xf32>
    %c0_6 = arith.constant 0 : index
    %c0_7 = arith.constant 0 : index
    %8 = vector.load %arg5[%c0_6, %c0_7] : memref<128x32xf32, #tpu.memory_space<vmem>>, vector<128x32xf32>
    %cst_8 = arith.constant dense<0.000000e+00> : vector<8x32xf32>
    %9 = tpu.matmul %7, %8, %cst_8 {dimension_numbers = #tpu.dot_dimension_numbers<[1], [0], [0], [1], [0, 0, 1, 1], [], []>} : vector<8x128xf32>, vector<128x32xf32>, vector<8x32xf32> -> vector<8x32xf32>
    %c0_9 = arith.constant 0 : index
    %c0_10 = arith.constant 0 : index
    %10 = vector.load %arg6[%c0_9, %c0_10] : memref<1x32xf32, #tpu.memory_space<vmem>>, vector<1x32xf32>
    %11 = vector.broadcast %10 : vector<1x32xf32> to vector<8x32xf32>
    %12 = arith.addf %9, %11 : vector<8x32xf32>
    %c0_11 = arith.constant 0 : index
    %c0_12 = arith.constant 0 : index
    %13 = vector.load %arg7[%c0_11, %c0_12] : memref<8x32xf32, #tpu.memory_space<vmem>>, vector<8x32xf32>
    tpu.vector_store %arg7[%c0_11, %c0_12], %12 {strides = array<i32>} : memref<8x32xf32, #tpu.memory_space<vmem>>, vector<8x32xf32>,
    return
  }
  func.func @transform_0(%arg0: i32, %arg1: i32) -> (i32, i32) {
    %c0_i32 = arith.constant 0 : i32
    %c0_i32_0 = arith.constant 0 : i32
    return %arg0, %c0_i32 : i32, i32
  }
  func.func @transform_1(%arg0: i32, %arg1: i32) -> (i32, i32) {
    %c0_i32 = arith.constant 0 : i32
    %c0_i32_0 = arith.constant 0 : i32
    return %c0_i32, %arg1 : i32, i32
  }
  func.func @transform_2(%arg0: i32, %arg1: i32) -> (i32, i32) {
    %c0_i32 = arith.constant 0 : i32
    %c0_i32_0 = arith.constant 0 : i32
    return %c0_i32, %arg1 : i32, i32
  }
  func.func @transform_3(%arg0: i32, %arg1: i32) -> (i32, i32) {
    %c0_i32 = arith.constant 0 : i32
    %c0_i32_0 = arith.constant 0 : i32
    return %arg1, %c0_i32 : i32, i32
  }
  func.func @transform_4(%arg0: i32, %arg1: i32) -> (i32, i32) {
    %c0_i32 = arith.constant 0 : i32
    %c0_i32_0 = arith.constant 0 : i32
    %c0_i32_1 = arith.constant 0 : i32
    return %c0_i32, %c0_i32_0 : i32, i32
  }
  func.func @transform_5(%arg0: i32, %arg1: i32) -> (i32, i32) {
    %c0_i32 = arith.constant 0 : i32
    %c0_i32_0 = arith.constant 0 : i32
    return %arg0, %c0_i32 : i32, i32
  }
}

module attributes {stable_mosaic.version = 11 : i64} {
  func.func @_ffn_kernel_single_h(%arg0: i32, %arg1: i32, %arg2: memref<8x32xf32, #tpu.memory_space<vmem>>, %arg3: memref<32x128xf32, #tpu.memory_space<vmem>>, %arg4: memref<1x128xf32, #tpu.memory_space<vmem>>, %arg5: memref<128x32xf32, #tpu.memory_space<vmem>>, %arg6: memref<1x32xf32, #tpu.memory_space<vmem>>, %arg7: memref<8x32xf32, #tpu.memory_space<vmem>>) attributes {dimension_semantics = [#tpu.dimension_semantics<parallel>, #tpu.dimension_semantics<arbitrary>], iteration_bounds = array<i64: 2, 1>, scalar_prefetch = 0 : i64, scratch_operands = 0 : i64, tpu.core_type = #tpu.core_type<tc>, window_params = [{transform_indices = @transform_0, window_bounds = array<i64: 8, 32>}, {transform_indices = @transform_1, window_bounds = array<i64: 32, 128>}, {transform_indices = @transform_2, window_bounds = array<i64: 1, 128>}, {transform_indices = @transform_3, window_bounds = array<i64: 128, 32>}, {pipeline_mode = #tpu.pipeline_mode<synchronous>, transform_indices = @transform_4, window_bounds = array<i64: 1, 32>}, {transform_indices = @transform_5, window_bounds = array<i64: 8, 32>}]} {
    %c0 = arith.constant 0 : index
    %c0_0 = arith.constant 0 : index
    %0 = vector.load %arg2[%c0, %c0_0] : memref<8x32xf32, #tpu.memory_space<vmem>>, vector<8x32xf32>
    %c0_1 = arith.constant 0 : index
    %c0_2 = arith.constant 0 : index
    %1 = vector.load %arg3[%c0_1, %c0_2] : memref<32x128xf32, #tpu.memory_space<vmem>>, vector<32x128xf32>
    %cst = arith.constant dense<0.000000e+00> : vector<8x128xf32>
    %2 = tpu.matmul %0, %1, %cst {dimension_numbers = #tpu.dot_dimension_numbers<[1], [0], [0], [1], [0, 0, 1, 1], [], []>} : vector<8x32xf32>, vector<32x128xf32>, vector<8x128xf32> -> vector<8x128xf32>
    %c0_3 = arith.constant 0 : index
    %c0_4 = arith.constant 0 : index
    %3 = vector.load %arg4[%c0_3, %c0_4] : memref<1x128xf32, #tpu.memory_space<vmem>>, vector<1x128xf32>
    %4 = vector.broadcast %3 : vector<1x128xf32> to vector<8x128xf32>
    %5 = arith.addf %2, %4 : vector<8x128xf32>
    %cst_5 = arith.constant 0.000000e+00 : f32
    %6 = vector.broadcast %cst_5 : f32 to vector<8x128xf32>
    %7 = arith.maximumf %5, %6 : vector<8x128xf32>
    %c0_6 = arith.constant 0 : index
    %c0_7 = arith.constant 0 : index
    %8 = vector.load %arg5[%c0_6, %c0_7] : memref<128x32xf32, #tpu.memory_space<vmem>>, vector<128x32xf32>
    %cst_8 = arith.constant dense<0.000000e+00> : vector<8x32xf32>
    %9 = tpu.matmul %7, %8, %cst_8 {dimension_numbers = #tpu.dot_dimension_numbers<[1], [0], [0], [1], [0, 0, 1, 1], [], []>} : vector<8x128xf32>, vector<128x32xf32>, vector<8x32xf32> -> vector<8x32xf32>
    %c0_9 = arith.constant 0 : index
    %c0_10 = arith.constant 0 : index
    %10 = vector.load %arg6[%c0_9, %c0_10] : memref<1x32xf32, #tpu.memory_space<vmem>>, vector<1x32xf32>
    %11 = vector.broadcast %10 : vector<1x32xf32> to vector<8x32xf32>
    %12 = arith.addf %9, %11 : vector<8x32xf32>
    %c0_11 = arith.constant 0 : index
    %c0_12 = arith.constant 0 : index
    %13 = vector.load %arg7[%c0_11, %c0_12] : memref<8x32xf32, #tpu.memory_space<vmem>>, vector<8x32xf32>
    tpu.vector_store %arg7[%c0_11, %c0_12], %12 {strides = array<i32>} : memref<8x32xf32, #tpu.memory_space<vmem>>, vector<8x32xf32>,
    return
  }
  func.func @transform_0(%arg0: i32, %arg1: i32) -> (i32, i32) {
    %c0_i32 = arith.constant 0 : i32
    %c0_i32_0 = arith.constant 0 : i32
    return %arg0, %c0_i32 : i32, i32
  }
  func.func @transform_1(%arg0: i32, %arg1: i32) -> (i32, i32) {
    %c0_i32 = arith.constant 0 : i32
    %c0_i32_0 = arith.constant 0 : i32
    return %c0_i32, %arg1 : i32, i32
  }
  func.func @transform_2(%arg0: i32, %arg1: i32) -> (i32, i32) {
    %c0_i32 = arith.constant 0 : i32
    %c0_i32_0 = arith.constant 0 : i32
    return %c0_i32, %arg1 : i32, i32
  }
  func.func @transform_3(%arg0: i32, %arg1: i32) -> (i32, i32) {
    %c0_i32 = arith.constant 0 : i32
    %c0_i32_0 = arith.constant 0 : i32
    return %arg1, %c0_i32 : i32, i32
  }
  func.func @transform_4(%arg0: i32, %arg1: i32) -> (i32, i32) {
    %c0_i32 = arith.constant 0 : i32
    %c0_i32_0 = arith.constant 0 : i32
    %c0_i32_1 = arith.constant 0 : i32
    return %c0_i32, %c0_i32_0 : i32, i32
  }
  func.func @transform_5(%arg0: i32, %arg1: i32) -> (i32, i32) {
    %c0_i32 = arith.constant 0 : i32
    %c0_i32_0 = arith.constant 0 : i32
    return %arg0, %c0_i32 : i32, i32
  }
}

</mosaic_0001>

<llo_original>
// kernel: tpu_custom_call.1
$region0: #{tpu_custom_call.1}
  #allocation0 [shape = 'u32[]', space=smem, size = 0x4, offset = 0x4, fixed_abs, tag = 'smem constant byte address 0x4 - core index']
  #allocation1 [shape = 'u32[144,128]{1,0:T(1,128)}', space=vmem, size = 0x12000, scoped, tag = 'internal scratch']
  %s0 = inlined_call_operand.vmem [shape: f32[16,32], index: 0, kind: input, shape index: {}]
  %s1 = inlined_call_operand.vmem [shape: f32[32,128], index: 1, kind: input, shape index: {}]
  %s2 = inlined_call_operand.vmem [shape: f32[1,128], index: 2, kind: input, shape index: {}]
  %s3 = inlined_call_operand.vmem [shape: f32[128,32], index: 3, kind: input, shape index: {}]
  %s4 = inlined_call_operand.vmem [shape: f32[1,32], index: 4, kind: input, shape index: {}]
  %s5 = inlined_call_operand.hbm [shape: f32[16,32], index: 5, kind: output, shape index: {}]
  %s6 = sld [smem:[#allocation0]]
  $region53: #{tpu_custom_call.1} parent=0
    _
  %s8 = ssub.s32 1, %s6
  %s9 = scalar_select 0, %s8, %s6
  $region1: #{tpu_custom_call.1} parent=0
    #allocation2 [shape = 'u8[8192]{0}', space=vmem, size = 0x2000, scoped, tag = 'output window, operand 0']
    #allocation3 [shape = 's32[2]{0}', space=sflag, size = 0x8, scoped, tag = 'scoped memory for tpu_custom_call.1']
    %10 = vsyncpa [#allocation3], 0
    %s11 = scalar_lea.sflag [#allocation3], 1
    %12 = vsyncpa %s11, 0
    loop: start=0, step=1, limit=4
    $region2: #{tpu_custom_call.1} parent=1 // loop_pre_header
      _
    $region3: #{tpu_custom_call.1} parent=1 // loop_header
      %s14 = sphi 0, %s18
      %p15 = scmp.ge.s32.totalorder %s14, 4
      %s21 = sphi 0, %s33
      %s22 = sphi 0, %s29
      %s23 = sphi 0, %s21
      %s24 = sphi 0, %s22
      %s25 = sphi 0, %s23
      %s26 = sphi 0, %s24
      %s36 = sphi 0, %s38
      %s39 = sphi 0, %s36
      %s40 = sphi 0, %s39
      %s56 = sphi 0, %s40
      %s62 = sphi 0, %s64
      %s65 = sphi 0, %s62
      %s66 = sphi 0, %s65
      %s82 = sphi 0, %s66
      %s88 = sphi 0, %s90
      %s91 = sphi 0, %s88
      %s92 = sphi 0, %s91
      %s108 = sphi 0, %s92
      %s114 = sphi 0, %s116
      %s117 = sphi 0, %s114
      %s118 = sphi 0, %s117
      %s134 = sphi 0, %s118
      %s138 = sphi 0, %s138
      %s140 = sphi 0, %s138
      %s141 = sphi 0, %s140
      %s155 = sphi 0, %s141
      %s161 = sphi 0, %s163
      %s164 = sphi 0, %s161
      %s165 = sphi 0, %s164
      %s181 = sphi 0, %s165
    $region4: #{tpu_custom_call.1} parent=1 // loop_header_branch
      %17 = sbr.rel (%p15) target = $region8
    $region5: #{tpu_custom_call.1} parent=1 // loop_body
      %s19 = ssub.s32 %s14, 1
      %s20 = ssub.s32 %s14, 2
      %s27 = sadd.s32 1, %s22
      %p28 = scmp.ge.s32.totalorder %s27, 1
      %s29 = scalar_select %p28, 0, %s27
      %s30 = sadd.s32 1, %s21
      %s31 = scalar_select %p28, %s30, %s21
      %p32 = scmp.ge.s32.totalorder %s31, 2
      %s33 = scalar_select %p32, 0, %s31
      %s34 = ssub.s32 %s21, %s33
      %p35 = scmp.eq.s32.totalorder %s34, 0
      %s37 = sadd.s32 %s36, 1
      %s38 = scalar_select %p35, %s36, %s37
      %p41 = pneg %p35
      %p42 = scmp.eq.s32.totalorder %s14, 1
      %p43 = por %p41, %p42
      %p44 = scmp.ne.s32.totalorder %s36, %s39
      %p45 = scmp.eq.s32.totalorder %s14, 0
      %p46 = por %p44, %p45
      %p47 = scmp.ne.s32.totalorder %s36, %s39
      %p48 = scmp.eq.s32.totalorder %s19, 1
      %p49 = por %p47, %p48
      %p50 = scmp.ne.s32.totalorder %s39, %s40
      %p51 = scmp.eq.s32.totalorder %s19, 0
      %p52 = por %p50, %p51
      %p53 = scmp.ne.s32.totalorder %s39, %s40
      %p54 = scmp.eq.s32.totalorder %s20, 1
      %p55 = por %p53, %p54
      %p57 = scmp.ne.s32.totalorder %s40, %s56
      %p58 = scmp.eq.s32.totalorder %s20, 0
      %p59 = por %p57, %p58
      %s60 = ssub.s32 %s22, %s29
      %p61 = scmp.eq.s32.totalorder %s60, 0
      %s63 = sadd.s32 %s62, 1
      %s64 = scalar_select %p61, %s62, %s63
      %p67 = pneg %p61
      %p68 = scmp.eq.s32.totalorder %s14, 1
      %p69 = por %p67, %p68
      %p70 = scmp.ne.s32.totalorder %s62, %s65
      %p71 = scmp.eq.s32.totalorder %s14, 0
      %p72 = por %p70, %p71
      %p73 = scmp.ne.s32.totalorder %s62, %s65
      %p74 = scmp.eq.s32.totalorder %s19, 1
      %p75 = por %p73, %p74
      %p76 = scmp.ne.s32.totalorder %s65, %s66
      %p77 = scmp.eq.s32.totalorder %s19, 0
      %p78 = por %p76, %p77
      %p79 = scmp.ne.s32.totalorder %s65, %s66
      %p80 = scmp.eq.s32.totalorder %s20, 1
      %p81 = por %p79, %p80
      %p83 = scmp.ne.s32.totalorder %s66, %s82
      %p84 = scmp.eq.s32.totalorder %s20, 0
      %p85 = por %p83, %p84
      %s86 = ssub.s32 %s22, %s29
      %p87 = scmp.eq.s32.totalorder %s86, 0
      %s89 = sadd.s32 %s88, 1
      %s90 = scalar_select %p87, %s88, %s89
      %p93 = pneg %p87
      %p94 = scmp.eq.s32.totalorder %s14, 1
      %p95 = por %p93, %p94
      %p96 = scmp.ne.s32.totalorder %s88, %s91
      %p97 = scmp.eq.s32.totalorder %s14, 0
      %p98 = por %p96, %p97
      %p99 = scmp.ne.s32.totalorder %s88, %s91
      %p100 = scmp.eq.s32.totalorder %s19, 1
      %p101 = por %p99, %p100
      %p102 = scmp.ne.s32.totalorder %s91, %s92
      %p103 = scmp.eq.s32.totalorder %s19, 0
      %p104 = por %p102, %p103
      %p105 = scmp.ne.s32.totalorder %s91, %s92
      %p106 = scmp.eq.s32.totalorder %s20, 1
      %p107 = por %p105, %p106
      %p109 = scmp.ne.s32.totalorder %s92, %s108
      %p110 = scmp.eq.s32.totalorder %s20, 0
      %p111 = por %p109, %p110
      %s112 = ssub.s32 %s22, %s29
      %p113 = scmp.eq.s32.totalorder %s112, 0
      %s115 = sadd.s32 %s114, 1
      %s116 = scalar_select %p113, %s114, %s115
      %p119 = pneg %p113
      %p120 = scmp.eq.s32.totalorder %s14, 1
      %p121 = por %p119, %p120
      %p122 = scmp.ne.s32.totalorder %s114, %s117
      %p123 = scmp.eq.s32.totalorder %s14, 0
      %p124 = por %p122, %p123
      %p125 = scmp.ne.s32.totalorder %s114, %s117
      %p126 = scmp.eq.s32.totalorder %s19, 1
      %p127 = por %p125, %p126
      %p128 = scmp.ne.s32.totalorder %s117, %s118
      %p129 = scmp.eq.s32.totalorder %s19, 0
      %p130 = por %p128, %p129
      %p131 = scmp.ne.s32.totalorder %s117, %s118
      %p132 = scmp.eq.s32.totalorder %s20, 1
      %p133 = por %p131, %p132
      %p135 = scmp.ne.s32.totalorder %s118, %s134
      %p136 = scmp.eq.s32.totalorder %s20, 0
      %p137 = por %p135, %p136
      %s139 = sadd.s32 %s138, 1
      %p142 = scmp.eq.s32.totalorder %s14, 1
      %p143 = scmp.ne.s32.totalorder %s138, %s140
      %p144 = scmp.eq.s32.totalorder %s14, 0
      %p145 = por %p143, %p144
      %p146 = scmp.ne.s32.totalorder %s138, %s140
      %p147 = scmp.eq.s32.totalorder %s19, 1
      %p148 = por %p146, %p147
      %p149 = scmp.ne.s32.totalorder %s140, %s141
      %p150 = scmp.eq.s32.totalorder %s19, 0
      %p151 = por %p149, %p150
      %p152 = scmp.ne.s32.totalorder %s140, %s141
      %p153 = scmp.eq.s32.totalorder %s20, 1
      %p154 = por %p152, %p153
      %p156 = scmp.ne.s32.totalorder %s141, %s155
      %p157 = scmp.eq.s32.totalorder %s20, 0
      %p158 = por %p156, %p157
      %s159 = ssub.s32 %s21, %s33
      %p160 = scmp.eq.s32.totalorder %s159, 0
      %s162 = sadd.s32 %s161, 1
      %s163 = scalar_select %p160, %s161, %s162
      %p166 = pneg %p160
      %p167 = scmp.eq.s32.totalorder %s14, 1
      %p168 = por %p166, %p167
      %p169 = scmp.ne.s32.totalorder %s161, %s164
      %p170 = scmp.eq.s32.totalorder %s14, 0
      %p171 = por %p169, %p170
      %p172 = scmp.ne.s32.totalorder %s161, %s164
      %p173 = scmp.eq.s32.totalorder %s19, 1
      %p174 = por %p172, %p173
      %p175 = scmp.ne.s32.totalorder %s164, %s165
      %p176 = scmp.eq.s32.totalorder %s19, 0
      %p177 = por %p175, %p176
      %p178 = scmp.ne.s32.totalorder %s164, %s165
      %p179 = scmp.eq.s32.totalorder %s20, 1
      %p180 = por %p178, %p179
      %p182 = scmp.ne.s32.totalorder %s165, %s181
      %p183 = scmp.eq.s32.totalorder %s20, 0
      %p184 = por %p182, %p183
      %p185 = scmp.le.s32.totalorder 1, %s14
      %p186 = scmp.lt.s32.totalorder %s14, 3
      %p187 = pnand %p185, %p186
      %p188 = pneg %p187
      // Predicated region
      $region9: #{tpu_custom_call.1} parent=5 // pred_check
        _
      $region10: #{tpu_custom_call.1} parent=5 // pred_check_branch
        %190 = sbr.rel (%p187) target = $region12
      $region11: #{tpu_custom_call.1} parent=5 // pred_region
        %s191 = ssub.s32 %s14, 1
        // Predicated region
        $region13: #{tpu_custom_call.1} parent=11 // pred_check
          %p192 = pneg %p78
        $region14: #{tpu_custom_call.1} parent=11 // pred_check_branch
          %194 = sbr.rel (%p192) target = $region16
        $region15: #{tpu_custom_call.1} parent=11 // pred_region
          %p195 = scmp.lt.s32.totalorder %s24, 0
          %s196 = scalar_select %p195, %s24, 0
          %s197 = smul.addr %s196, 8
          %s198 = scalar_lea.vmem %s1, %s197
        $region16: #{tpu_custom_call.1} parent=11 // pred_fallthru
          _
        // Predicated region
        $region17: #{tpu_custom_call.1} parent=11 // pred_check
          %p199 = pneg %p104
        $region18: #{tpu_custom_call.1} parent=11 // pred_check_branch
          %201 = sbr.rel (%p199) target = $region20
        $region19: #{tpu_custom_call.1} parent=11 // pred_region
          %p202 = scmp.lt.s32.totalorder %s24, 0
          %s203 = scalar_select %p202, %s24, 0
          %s204 = scalar_lea.vmem %s2, %s203
        $region20: #{tpu_custom_call.1} parent=11 // pred_fallthru
          _
        // Predicated region
        $region21: #{tpu_custom_call.1} parent=11 // pred_check
          %p205 = pneg %p130
        $region22: #{tpu_custom_call.1} parent=11 // pred_check_branch
          %207 = sbr.rel (%p205) target = $region24
        $region23: #{tpu_custom_call.1} parent=11 // pred_region
          %s208 = smul.u32 16, %s24
          %p209 = scmp.lt.s32.totalorder %s208, 15
          %s210 = scalar_select %p209, %s208, 15
          %s211 = smul.addr %s210, 8
          %s212 = scalar_lea.vmem %s3, %s211
          %s213 = smul.u32 16, %s24
        $region24: #{tpu_custom_call.1} parent=11 // pred_fallthru
          _
        // Predicated region
        $region25: #{tpu_custom_call.1} parent=11 // pred_check
          %p214 = pneg %p151
        $region26: #{tpu_custom_call.1} parent=11 // pred_check_branch
          %216 = sbr.rel (%p214) target = $region28
        $region27: #{tpu_custom_call.1} parent=11 // pred_region
          _
        $region28: #{tpu_custom_call.1} parent=11 // pred_fallthru
          _
      $region12: #{tpu_custom_call.1} parent=5 // pred_fallthru
        _
      %p217 = scmp.lt.s32.totalorder %s14, 2
      // Predicated region
      $region29: #{tpu_custom_call.1} parent=5 // pred_check
        %p218 = pneg %p217
      $region30: #{tpu_custom_call.1} parent=5 // pred_check_branch
        %220 = sbr.rel (%p218) target = $region32
      $region31: #{tpu_custom_call.1} parent=5 // pred_region
        // Predicated region
        $region33: #{tpu_custom_call.1} parent=31 // pred_check
          %p221 = pneg %p46
        $region34: #{tpu_custom_call.1} parent=31 // pred_check_branch
          %223 = sbr.rel (%p221) target = $region36
        $region35: #{tpu_custom_call.1} parent=31 // pred_region
          %p224 = scmp.lt.s32.totalorder %s21, 1
          %s225 = scalar_select %p224, %s21, 1
          %s226 = smul.addr %s225, 8
          %s227 = scalar_lea.vmem %s0, %s226
        $region36: #{tpu_custom_call.1} parent=31 // pred_fallthru
          _
      $region32: #{tpu_custom_call.1} parent=5 // pred_fallthru
        _
      %p228 = scmp.le.s32.totalorder 1, %s14
      %p229 = scmp.lt.s32.totalorder %s14, 3
      %p230 = pnand %p228, %p229
      %p231 = pneg %p230
      // Predicated region
      $region37: #{tpu_custom_call.1} parent=5 // pred_check
        _
      $region38: #{tpu_custom_call.1} parent=5 // pred_check_branch
        %233 = sbr.rel (%p230) target = $region40
      $region39: #{tpu_custom_call.1} parent=5 // pred_region
        %s234 = ssub.s32 %s14, 1
        %p235 = scmp.lt.s32.totalorder %s23, 1
        %s236 = scalar_select %p235, %s23, 1
        %s237 = smul.addr %s236, 8
        %s238 = scalar_lea.vmem %s0, %s237
        %p239 = pneg %p52
        %p240 = pneg %p49
        %p241 = scmp.lt.s32.totalorder %s24, 0
        %s242 = scalar_select %p241, %s24, 0
        %s243 = smul.addr %s242, 8
        %s244 = scalar_lea.vmem %s1, %s243
        %p245 = pneg %p78
        %p246 = pneg %p75
        %p247 = scmp.lt.s32.totalorder %s24, 0
        %s248 = scalar_select %p247, %s24, 0
        %s249 = scalar_lea.vmem %s2, %s248
        %p250 = pneg %p104
        %p251 = pneg %p101
        %s252 = smul.u32 16, %s24
        %p253 = scmp.lt.s32.totalorder %s252, 15
        %s254 = scalar_select %p253, %s252, 15
        %s255 = smul.addr %s254, 8
        %s256 = scalar_lea.vmem %s3, %s255
        %p257 = pneg %p130
        %p258 = pneg %p127
        %p259 = pneg %p151
        %p260 = pneg %p148
        %p261 = pneg %p177
        %p262 = pneg %p174
        %s263 = sand.u32 %s164, 1
        %s264 = scalar_lea.sflag [#allocation3], %s263
        %s265 = sand.u32 %s164, 1
        %s266 = smul.addr %s265, 8
        %s267 = scalar_lea.vmem [#allocation2], %s266
        %p268 = scmp.lt.s32.totalorder %s23, 1
        %s269 = scalar_select %p268, %s23, 1
        %s270 = smul.addr %s269, 8
        %s271 = scalar_lea.vmem %s0, %s270
        %p272 = scmp.lt.s32.totalorder %s24, 0
        %s273 = scalar_select %p272, %s24, 0
        %s274 = smul.addr %s273, 8
        %s275 = scalar_lea.vmem %s1, %s274
        %p276 = scmp.lt.s32.totalorder %s24, 0
        %s277 = scalar_select %p276, %s24, 0
        %s278 = scalar_lea.vmem %s2, %s277
        %s279 = smul.u32 16, %s24
        %p280 = scmp.lt.s32.totalorder %s279, 15
        %s281 = scalar_select %p280, %s279, 15
        %s282 = smul.addr %s281, 8
        %s283 = scalar_lea.vmem %s3, %s282
        %s284 = smul.u32 16, %s24
        %v285 = vld [vmem:[%s271] sm:$0xff]
        %v286 = vld [vmem:[%s275] sm:$0xff]
        %v287 = vld [vmem:[%s275 + $0x8] sm:$0xff]
        %v288 = vld [vmem:[%s275 + $0x10] sm:$0xff]
        %v289 = vld [vmem:[%s275 + $0x18] sm:$0xff]
        %v290 = vld [vmem:[%s278] sm:$0x1]
        %v292 = vlaneseq
        %v293 = vshrl.u32 %v292, 7
        %v294 = vsub.s32 0, %v293
        %v295 = vrot.slane %v290, %v294
        %vm297 = vcmask 261120
        %v299 = vsel %vm297, %v285, 0
        %301 = vmatprep.subr.mxu0 0.0
        %302 = vmatpush1.msra.mxu0 %v286
        %303 = vmatprep.subr.mxu0 0.0
        %304 = vmatpush1.msra.mxu0 %v287
        %305 = vmatprep.subr.mxu0 0.0
        %306 = vmatpush1.msra.mxu0 %v288
        %307 = vmatprep.subr.mxu0 0.0
        %308 = vmatpush1.msra.mxu0 %v289
        %309 = vmatprep.subr.mxu0 0.0
        %310 = vmatpush1.msra.mxu0 0.0
        %311 = vmatprep.subr.mxu0 0.0
        %312 = vmatpush1.msra.mxu0 0.0
        %313 = vmatprep.subr.mxu0 0.0
        %314 = vmatpush1.msra.mxu0 0.0
        %315 = vmatprep.subr.mxu0 0.0
        %316 = vmatpush1.msra.mxu0 0.0
        %317 = vmatprep.subr.mxu0 0.0
        %318 = vmatpush1.msra.mxu0 0.0
        %319 = vmatprep.subr.mxu0 0.0
        %320 = vmatpush1.msra.mxu0 0.0
        %321 = vmatprep.subr.mxu0 0.0
        %322 = vmatpush1.msra.mxu0 0.0
        %323 = vmatprep.subr.mxu0 0.0
        %324 = vmatpush1.msra.mxu0 0.0
        %325 = vmatprep.subr.mxu0 0.0
        %326 = vmatpush1.msra.mxu0 0.0
        %327 = vmatprep.subr.mxu0 0.0
        %328 = vmatpush1.msra.mxu0 0.0
        %329 = vmatprep.subr.mxu0 0.0
        %330 = vmatpush1.msra.mxu0 0.0
        %331 = vmatprep.subr.mxu0 0.0
        %332 = vmatpush1.msra.mxu0 0.0
        %333 = vmatprep.subr.mxu0 0.0
        %334 = vmatpush1.msra.mxu0 0.0
        %335 = vmatprep.subr.mxu0 0.0
        %336 = vmatpush1.msra.mxu0 0.0
        %337 = vmatprep.subr.mxu0 0.0
        %338 = vmatpush1.msra.mxu0 0.0
        %339 = vmatprep.subr.mxu0 0.0
        %340 = vmatpush1.msra.mxu0 0.0
        %341 = vmatprep.subr.mxu0 0.0
        %342 = vmatpush1.msra.mxu0 0.0
        %343 = vmatprep.subr.mxu0 0.0
        %344 = vmatpush1.msra.mxu0 0.0
        %345 = vmatprep.subr.mxu0 0.0
        %346 = vmatpush1.msra.mxu0 0.0
        %347 = vmatprep.subr.mxu0 0.0
        %348 = vmatpush1.msra.mxu0 0.0
        %349 = vmatprep.subr.mxu0 0.0
        %350 = vmatpush1.msra.mxu0 0.0
        %351 = vmatprep.subr.mxu0 0.0
        %352 = vmatpush1.msra.mxu0 0.0
        %353 = vmatprep.subr.mxu0 0.0
        %354 = vmatpush1.msra.mxu0 0.0
        %355 = vmatprep.subr.mxu0 0.0
        %356 = vmatpush1.msra.mxu0 0.0
        %357 = vmatprep.subr.mxu0 0.0
        %358 = vmatpush1.msra.mxu0 0.0
        %359 = vmatprep.subr.mxu0 0.0
        %360 = vmatpush1.msra.mxu0 0.0
        %361 = vmatprep.subr.mxu0 0.0
        %362 = vmatpush1.msra.mxu0 0.0
        %363 = vmatprep.subr.mxu0 0.0
        %364 = vmatpush1.msra.mxu0 0.0
        %365 = vmatprep.mubr.f32.mxu0 0.0
        %366 = vmatmul.mubr.f32.gmra.mrb[0].mxu0 %v299
        %v367 = vpop.f32.mrb[0].mxu0
        %v368 = vadd.f32 %v295, %v367
        %v369 = vpop.f32.mrb[0].mxu0
        %370 = vdwg.mxu0
        %v371 = vmax.f32 %v368, 0.0
        %v372 = vld [vmem:[%s283] sm:$0xff]
        %v373 = vld [vmem:[%s283 + $0x8] sm:$0xff]
        %v374 = vld [vmem:[%s283 + $0x10] sm:$0xff]
        %v375 = vld [vmem:[%s283 + $0x18] sm:$0xff]
        %v376 = vld [vmem:[%s283 + $0x20] sm:$0xff]
        %v377 = vld [vmem:[%s283 + $0x28] sm:$0xff]
        %v378 = vld [vmem:[%s283 + $0x30] sm:$0xff]
        %v379 = vld [vmem:[%s283 + $0x38] sm:$0xff]
        %v380 = vld [vmem:[%s283 + $0x40] sm:$0xff]
        %v381 = vld [vmem:[%s283 + $0x48] sm:$0xff]
        %v382 = vld [vmem:[%s283 + $0x50] sm:$0xff]
        %v383 = vld [vmem:[%s283 + $0x58] sm:$0xff]
        %v384 = vld [vmem:[%s283 + $0x60] sm:$0xff]
        %v385 = vld [vmem:[%s283 + $0x68] sm:$0xff]
        %v386 = vld [vmem:[%s283 + $0x70] sm:$0xff]
        %v387 = vld [vmem:[%s283 + $0x78] sm:$0xff]
        %v388 = vld [vmem:[%s4] sm:$0x1]
        %v390 = vlaneseq
        %v391 = vshrl.u32 %v390, 7
        %v392 = vsub.s32 0, %v391
        %v393 = vrot.slane %v388, %v392
        %395 = vmatprep.subr.mxu0 0.0
        %396 = vmatpush1.msra.mxu0 %v372
        %397 = vmatprep.subr.mxu0 0.0
        %398 = vmatpush1.msra.mxu0 %v373
        %399 = vmatprep.subr.mxu0 0.0
        %400 = vmatpush1.msra.mxu0 %v374
        %401 = vmatprep.subr.mxu0 0.0
        %402 = vmatpush1.msra.mxu0 %v375
        %403 = vmatprep.subr.mxu0 0.0
        %404 = vmatpush1.msra.mxu0 %v376
        %405 = vmatprep.subr.mxu0 0.0
        %406 = vmatpush1.msra.mxu0 %v377
        %407 = vmatprep.subr.mxu0 0.0
        %408 = vmatpush1.msra.mxu0 %v378
        %409 = vmatprep.subr.mxu0 0.0
        %410 = vmatpush1.msra.mxu0 %v379
        %411 = vmatprep.subr.mxu0 0.0
        %412 = vmatpush1.msra.mxu0 %v380
        %413 = vmatprep.subr.mxu0 0.0
        %414 = vmatpush1.msra.mxu0 %v381
        %415 = vmatprep.subr.mxu0 0.0
        %416 = vmatpush1.msra.mxu0 %v382
        %417 = vmatprep.subr.mxu0 0.0
        %418 = vmatpush1.msra.mxu0 %v383
        %419 = vmatprep.subr.mxu0 0.0
        %420 = vmatpush1.msra.mxu0 %v384
        %421 = vmatprep.subr.mxu0 0.0
        %422 = vmatpush1.msra.mxu0 %v385
        %423 = vmatprep.subr.mxu0 0.0
        %424 = vmatpush1.msra.mxu0 %v386
        %425 = vmatprep.subr.mxu0 0.0
        %426 = vmatpush1.msra.mxu0 %v387
        %427 = vmatprep.subr.mxu0 0.0
        %428 = vmatpush1.msra.mxu0 0.0
        %429 = vmatprep.subr.mxu0 0.0
        %430 = vmatpush1.msra.mxu0 0.0
        %431 = vmatprep.subr.mxu0 0.0
        %432 = vmatpush1.msra.mxu0 0.0
        %433 = vmatprep.subr.mxu0 0.0
        %434 = vmatpush1.msra.mxu0 0.0
        %435 = vmatprep.subr.mxu0 0.0
        %436 = vmatpush1.msra.mxu0 0.0
        %437 = vmatprep.subr.mxu0 0.0
        %438 = vmatpush1.msra.mxu0 0.0
        %439 = vmatprep.subr.mxu0 0.0
        %440 = vmatpush1.msra.mxu0 0.0
        %441 = vmatprep.subr.mxu0 0.0
        %442 = vmatpush1.msra.mxu0 0.0
        %443 = vmatprep.subr.mxu0 0.0
        %444 = vmatpush1.msra.mxu0 0.0
        %445 = vmatprep.subr.mxu0 0.0
        %446 = vmatpush1.msra.mxu0 0.0
        %447 = vmatprep.subr.mxu0 0.0
        %448 = vmatpush1.msra.mxu0 0.0
        %449 = vmatprep.subr.mxu0 0.0
        %450 = vmatpush1.msra.mxu0 0.0
        %451 = vmatprep.subr.mxu0 0.0
        %452 = vmatpush1.msra.mxu0 0.0
        %453 = vmatprep.subr.mxu0 0.0
        %454 = vmatpush1.msra.mxu0 0.0
        %455 = vmatprep.subr.mxu0 0.0
        %456 = vmatpush1.msra.mxu0 0.0
        %457 = vmatprep.subr.mxu0 0.0
        %458 = vmatpush1.msra.mxu0 0.0
        %459 = vmatprep.mubr.f32.mxu0 0.0
        %460 = vmatmul.mubr.f32.gmra.mrb[0].mxu0 %v371
        %v461 = vpop.f32.mrb[0].mxu0
        %v462 = vadd.f32 %v393, %v461
        %v463 = vpop.f32.mrb[0].mxu0
        %464 = vdwg.mxu0
        %465 = vst.msk [vmem:[%s267] sm:$0xff] %vm297, %v462
        %s466 = sand.u32 %s164, 1
        %s467 = scalar_lea.sflag [#allocation3], %s466
        %s468 = sand.u32 %s164, 1
        %s469 = smul.addr %s468, 8
        %s470 = scalar_lea.vmem [#allocation2], %s469
        // Predicated region
        $region41: #{tpu_custom_call.1} parent=39 // pred_check
          %p471 = pneg %p174
        $region42: #{tpu_custom_call.1} parent=39 // pred_check_branch
          %473 = sbr.rel (%p471) target = $region44
        $region43: #{tpu_custom_call.1} parent=39 // pred_region
          %s475 = ssub.s32 128, 128
          %476 = vsyncadd %s467, %s475
          %s477 = smul.addr %s23, 128
          %s478 = scalar_lea.hbm %s5, %s477
          %s480 = sshll.u32 %s470, 4
          %s481 = int_to_ptr.vmem [resolvable:$true] %s480
          %483 = dma.vmem_to_hbm [thread:$0]  %s481, 128, %s478, %s467
        $region44: #{tpu_custom_call.1} parent=39 // pred_fallthru
          _
      $region40: #{tpu_custom_call.1} parent=5 // pred_fallthru
        _
      %p484 = scmp.le.s32.totalorder 2, %s14
      // Predicated region
      $region45: #{tpu_custom_call.1} parent=5 // pred_check
        %p485 = pneg %p484
      $region46: #{tpu_custom_call.1} parent=5 // pred_check_branch
        %487 = sbr.rel (%p485) target = $region48
      $region47: #{tpu_custom_call.1} parent=5 // pred_region
        %s488 = ssub.s32 %s14, 2
        // Predicated region
        $region49: #{tpu_custom_call.1} parent=47 // pred_check
          %p489 = pneg %p180
        $region50: #{tpu_custom_call.1} parent=47 // pred_check_branch
          %491 = sbr.rel (%p489) target = $region52
        $region51: #{tpu_custom_call.1} parent=47 // pred_region
          %s492 = sand.u32 %s165, 1
          %s493 = scalar_lea.sflag [#allocation3], %s492
          %s494 = sand.u32 %s165, 1
          %s495 = smul.addr %s494, 8
          %s496 = scalar_lea.vmem [#allocation2], %s495
          %497 = dma.done %s493, 128
        $region52: #{tpu_custom_call.1} parent=47 // pred_fallthru
          _
      $region48: #{tpu_custom_call.1} parent=5 // pred_fallthru
        _
    $region6: #{tpu_custom_call.1} parent=1 // loop_footer
      %s18 = sadd.s32 1, %s14
    $region7: #{tpu_custom_call.1} parent=1 // loop_footer_branch
      %13 = sbr.rel target = $region3
    $region8: #{tpu_custom_call.1} parent=1 // loop_exit
      _
    %498 = vsyncpa [#allocation3], 1
    %s499 = scalar_lea.sflag [#allocation3], 1
    %500 = vsyncpa %s499, 1

// kernel: tpu_custom_call.1
$region0: #{tpu_custom_call.1}
  #allocation0 [shape = 'u32[]', space=smem, size = 0x4, offset = 0x4, fixed_abs, tag = 'smem constant byte address 0x4 - core index']
  #allocation1 [shape = 'u32[144,128]{1,0:T(1,128)}', space=vmem, size = 0x12000, scoped, tag = 'internal scratch']
  %s0 = inlined_call_operand.vmem [shape: f32[16,32], index: 0, kind: input, shape index: {}]
  %s1 = inlined_call_operand.vmem [shape: f32[32,128], index: 1, kind: input, shape index: {}]
  %s2 = inlined_call_operand.vmem [shape: f32[1,128], index: 2, kind: input, shape index: {}]
  %s3 = inlined_call_operand.vmem [shape: f32[128,32], index: 3, kind: input, shape index: {}]
  %s4 = inlined_call_operand.vmem [shape: f32[1,32], index: 4, kind: input, shape index: {}]
  %s5 = inlined_call_operand.hbm [shape: f32[16,32], index: 5, kind: output, shape index: {}]
  %s6 = sld [smem:[#allocation0]]
  $region53: #{tpu_custom_call.1} parent=0
    _
  %s8 = ssub.s32 1, %s6
  %s9 = scalar_select 0, %s8, %s6
  $region1: #{tpu_custom_call.1} parent=0
    #allocation2 [shape = 'u8[8192]{0}', space=vmem, size = 0x2000, scoped, tag = 'output window, operand 0']
    #allocation3 [shape = 's32[2]{0}', space=sflag, size = 0x8, scoped, tag = 'scoped memory for tpu_custom_call.1']
    %10 = vsyncpa [#allocation3], 0
    %s11 = scalar_lea.sflag [#allocation3], 1
    %12 = vsyncpa %s11, 0
    loop: start=0, step=1, limit=4
    $region2: #{tpu_custom_call.1} parent=1 // loop_pre_header
      _
    $region3: #{tpu_custom_call.1} parent=1 // loop_header
      %s14 = sphi 0, %s18
      %p15 = scmp.ge.s32.totalorder %s14, 4
      %s21 = sphi 0, %s33
      %s22 = sphi 0, %s29
      %s23 = sphi 0, %s21
      %s24 = sphi 0, %s22
      %s25 = sphi 0, %s23
      %s26 = sphi 0, %s24
      %s36 = sphi 0, %s38
      %s39 = sphi 0, %s36
      %s40 = sphi 0, %s39
      %s56 = sphi 0, %s40
      %s62 = sphi 0, %s64
      %s65 = sphi 0, %s62
      %s66 = sphi 0, %s65
      %s82 = sphi 0, %s66
      %s88 = sphi 0, %s90
      %s91 = sphi 0, %s88
      %s92 = sphi 0, %s91
      %s108 = sphi 0, %s92
      %s114 = sphi 0, %s116
      %s117 = sphi 0, %s114
      %s118 = sphi 0, %s117
      %s134 = sphi 0, %s118
      %s138 = sphi 0, %s138
      %s140 = sphi 0, %s138
      %s141 = sphi 0, %s140
      %s155 = sphi 0, %s141
      %s161 = sphi 0, %s163
      %s164 = sphi 0, %s161
      %s165 = sphi 0, %s164
      %s181 = sphi 0, %s165
    $region4: #{tpu_custom_call.1} parent=1 // loop_header_branch
      %17 = sbr.rel (%p15) target = $region8
    $region5: #{tpu_custom_call.1} parent=1 // loop_body
      %s19 = ssub.s32 %s14, 1
      %s20 = ssub.s32 %s14, 2
      %s27 = sadd.s32 1, %s22
      %p28 = scmp.ge.s32.totalorder %s27, 1
      %s29 = scalar_select %p28, 0, %s27
      %s30 = sadd.s32 1, %s21
      %s31 = scalar_select %p28, %s30, %s21
      %p32 = scmp.ge.s32.totalorder %s31, 2
      %s33 = scalar_select %p32, 0, %s31
      %s34 = ssub.s32 %s21, %s33
      %p35 = scmp.eq.s32.totalorder %s34, 0
      %s37 = sadd.s32 %s36, 1
      %s38 = scalar_select %p35, %s36, %s37
      %p41 = pneg %p35
      %p42 = scmp.eq.s32.totalorder %s14, 1
      %p43 = por %p41, %p42
      %p44 = scmp.ne.s32.totalorder %s36, %s39
      %p45 = scmp.eq.s32.totalorder %s14, 0
      %p46 = por %p44, %p45
      %p47 = scmp.ne.s32.totalorder %s36, %s39
      %p48 = scmp.eq.s32.totalorder %s19, 1
      %p49 = por %p47, %p48
      %p50 = scmp.ne.s32.totalorder %s39, %s40
      %p51 = scmp.eq.s32.totalorder %s19, 0
      %p52 = por %p50, %p51
      %p53 = scmp.ne.s32.totalorder %s39, %s40
      %p54 = scmp.eq.s32.totalorder %s20, 1
      %p55 = por %p53, %p54
      %p57 = scmp.ne.s32.totalorder %s40, %s56
      %p58 = scmp.eq.s32.totalorder %s20, 0
      %p59 = por %p57, %p58
      %s60 = ssub.s32 %s22, %s29
      %p61 = scmp.eq.s32.totalorder %s60, 0
      %s63 = sadd.s32 %s62, 1
      %s64 = scalar_select %p61, %s62, %s63
      %p67 = pneg %p61
      %p68 = scmp.eq.s32.totalorder %s14, 1
      %p69 = por %p67, %p68
      %p70 = scmp.ne.s32.totalorder %s62, %s65
      %p71 = scmp.eq.s32.totalorder %s14, 0
      %p72 = por %p70, %p71
      %p73 = scmp.ne.s32.totalorder %s62, %s65
      %p74 = scmp.eq.s32.totalorder %s19, 1
      %p75 = por %p73, %p74
      %p76 = scmp.ne.s32.totalorder %s65, %s66
      %p77 = scmp.eq.s32.totalorder %s19, 0
      %p78 = por %p76, %p77
      %p79 = scmp.ne.s32.totalorder %s65, %s66
      %p80 = scmp.eq.s32.totalorder %s20, 1
      %p81 = por %p79, %p80
      %p83 = scmp.ne.s32.totalorder %s66, %s82
      %p84 = scmp.eq.s32.totalorder %s20, 0
      %p85 = por %p83, %p84
      %s86 = ssub.s32 %s22, %s29
      %p87 = scmp.eq.s32.totalorder %s86, 0
      %s89 = sadd.s32 %s88, 1
      %s90 = scalar_select %p87, %s88, %s89
      %p93 = pneg %p87
      %p94 = scmp.eq.s32.totalorder %s14, 1
      %p95 = por %p93, %p94
      %p96 = scmp.ne.s32.totalorder %s88, %s91
      %p97 = scmp.eq.s32.totalorder %s14, 0
      %p98 = por %p96, %p97
      %p99 = scmp.ne.s32.totalorder %s88, %s91
      %p100 = scmp.eq.s32.totalorder %s19, 1
      %p101 = por %p99, %p100
      %p102 = scmp.ne.s32.totalorder %s91, %s92
      %p103 = scmp.eq.s32.totalorder %s19, 0
      %p104 = por %p102, %p103
      %p105 = scmp.ne.s32.totalorder %s91, %s92
      %p106 = scmp.eq.s32.totalorder %s20, 1
      %p107 = por %p105, %p106
      %p109 = scmp.ne.s32.totalorder %s92, %s108
      %p110 = scmp.eq.s32.totalorder %s20, 0
      %p111 = por %p109, %p110
      %s112 = ssub.s32 %s22, %s29
      %p113 = scmp.eq.s32.totalorder %s112, 0
      %s115 = sadd.s32 %s114, 1
      %s116 = scalar_select %p113, %s114, %s115
      %p119 = pneg %p113
      %p120 = scmp.eq.s32.totalorder %s14, 1
      %p121 = por %p119, %p120
      %p122 = scmp.ne.s32.totalorder %s114, %s117
      %p123 = scmp.eq.s32.totalorder %s14, 0
      %p124 = por %p122, %p123
      %p125 = scmp.ne.s32.totalorder %s114, %s117
      %p126 = scmp.eq.s32.totalorder %s19, 1
      %p127 = por %p125, %p126
      %p128 = scmp.ne.s32.totalorder %s117, %s118
      %p129 = scmp.eq.s32.totalorder %s19, 0
      %p130 = por %p128, %p129
      %p131 = scmp.ne.s32.totalorder %s117, %s118
      %p132 = scmp.eq.s32.totalorder %s20, 1
      %p133 = por %p131, %p132
      %p135 = scmp.ne.s32.totalorder %s118, %s134
      %p136 = scmp.eq.s32.totalorder %s20, 0
      %p137 = por %p135, %p136
      %s139 = sadd.s32 %s138, 1
      %p142 = scmp.eq.s32.totalorder %s14, 1
      %p143 = scmp.ne.s32.totalorder %s138, %s140
      %p144 = scmp.eq.s32.totalorder %s14, 0
      %p145 = por %p143, %p144
      %p146 = scmp.ne.s32.totalorder %s138, %s140
      %p147 = scmp.eq.s32.totalorder %s19, 1
      %p148 = por %p146, %p147
      %p149 = scmp.ne.s32.totalorder %s140, %s141
      %p150 = scmp.eq.s32.totalorder %s19, 0
      %p151 = por %p149, %p150
      %p152 = scmp.ne.s32.totalorder %s140, %s141
      %p153 = scmp.eq.s32.totalorder %s20, 1
      %p154 = por %p152, %p153
      %p156 = scmp.ne.s32.totalorder %s141, %s155
      %p157 = scmp.eq.s32.totalorder %s20, 0
      %p158 = por %p156, %p157
      %s159 = ssub.s32 %s21, %s33
      %p160 = scmp.eq.s32.totalorder %s159, 0
      %s162 = sadd.s32 %s161, 1
      %s163 = scalar_select %p160, %s161, %s162
      %p166 = pneg %p160
      %p167 = scmp.eq.s32.totalorder %s14, 1
      %p168 = por %p166, %p167
      %p169 = scmp.ne.s32.totalorder %s161, %s164
      %p170 = scmp.eq.s32.totalorder %s14, 0
      %p171 = por %p169, %p170
      %p172 = scmp.ne.s32.totalorder %s161, %s164
      %p173 = scmp.eq.s32.totalorder %s19, 1
      %p174 = por %p172, %p173
      %p175 = scmp.ne.s32.totalorder %s164, %s165
      %p176 = scmp.eq.s32.totalorder %s19, 0
      %p177 = por %p175, %p176
      %p178 = scmp.ne.s32.totalorder %s164, %s165
      %p179 = scmp.eq.s32.totalorder %s20, 1
      %p180 = por %p178, %p179
      %p182 = scmp.ne.s32.totalorder %s165, %s181
      %p183 = scmp.eq.s32.totalorder %s20, 0
      %p184 = por %p182, %p183
      %p185 = scmp.le.s32.totalorder 1, %s14
      %p186 = scmp.lt.s32.totalorder %s14, 3
      %p187 = pnand %p185, %p186
      %p188 = pneg %p187
      // Predicated region
      $region9: #{tpu_custom_call.1} parent=5 // pred_check
        _
      $region10: #{tpu_custom_call.1} parent=5 // pred_check_branch
        %190 = sbr.rel (%p187) target = $region12
      $region11: #{tpu_custom_call.1} parent=5 // pred_region
        %s191 = ssub.s32 %s14, 1
        // Predicated region
        $region13: #{tpu_custom_call.1} parent=11 // pred_check
          %p192 = pneg %p78
        $region14: #{tpu_custom_call.1} parent=11 // pred_check_branch
          %194 = sbr.rel (%p192) target = $region16
        $region15: #{tpu_custom_call.1} parent=11 // pred_region
          %p195 = scmp.lt.s32.totalorder %s24, 0
          %s196 = scalar_select %p195, %s24, 0
          %s197 = smul.addr %s196, 8
          %s198 = scalar_lea.vmem %s1, %s197
        $region16: #{tpu_custom_call.1} parent=11 // pred_fallthru
          _
        // Predicated region
        $region17: #{tpu_custom_call.1} parent=11 // pred_check
          %p199 = pneg %p104
        $region18: #{tpu_custom_call.1} parent=11 // pred_check_branch
          %201 = sbr.rel (%p199) target = $region20
        $region19: #{tpu_custom_call.1} parent=11 // pred_region
          %p202 = scmp.lt.s32.totalorder %s24, 0
          %s203 = scalar_select %p202, %s24, 0
          %s204 = scalar_lea.vmem %s2, %s203
        $region20: #{tpu_custom_call.1} parent=11 // pred_fallthru
          _
        // Predicated region
        $region21: #{tpu_custom_call.1} parent=11 // pred_check
          %p205 = pneg %p130
        $region22: #{tpu_custom_call.1} parent=11 // pred_check_branch
          %207 = sbr.rel (%p205) target = $region24
        $region23: #{tpu_custom_call.1} parent=11 // pred_region
          %s208 = smul.u32 16, %s24
          %p209 = scmp.lt.s32.totalorder %s208, 15
          %s210 = scalar_select %p209, %s208, 15
          %s211 = smul.addr %s210, 8
          %s212 = scalar_lea.vmem %s3, %s211
          %s213 = smul.u32 16, %s24
        $region24: #{tpu_custom_call.1} parent=11 // pred_fallthru
          _
        // Predicated region
        $region25: #{tpu_custom_call.1} parent=11 // pred_check
          %p214 = pneg %p151
        $region26: #{tpu_custom_call.1} parent=11 // pred_check_branch
          %216 = sbr.rel (%p214) target = $region28
        $region27: #{tpu_custom_call.1} parent=11 // pred_region
          _
        $region28: #{tpu_custom_call.1} parent=11 // pred_fallthru
          _
      $region12: #{tpu_custom_call.1} parent=5 // pred_fallthru
        _
      %p217 = scmp.lt.s32.totalorder %s14, 2
      // Predicated region
      $region29: #{tpu_custom_call.1} parent=5 // pred_check
        %p218 = pneg %p217
      $region30: #{tpu_custom_call.1} parent=5 // pred_check_branch
        %220 = sbr.rel (%p218) target = $region32
      $region31: #{tpu_custom_call.1} parent=5 // pred_region
        // Predicated region
        $region33: #{tpu_custom_call.1} parent=31 // pred_check
          %p221 = pneg %p46
        $region34: #{tpu_custom_call.1} parent=31 // pred_check_branch
          %223 = sbr.rel (%p221) target = $region36
        $region35: #{tpu_custom_call.1} parent=31 // pred_region
          %p224 = scmp.lt.s32.totalorder %s21, 1
          %s225 = scalar_select %p224, %s21, 1
          %s226 = smul.addr %s225, 8
          %s227 = scalar_lea.vmem %s0, %s226
        $region36: #{tpu_custom_call.1} parent=31 // pred_fallthru
          _
      $region32: #{tpu_custom_call.1} parent=5 // pred_fallthru
        _
      %p228 = scmp.le.s32.totalorder 1, %s14
      %p229 = scmp.lt.s32.totalorder %s14, 3
      %p230 = pnand %p228, %p229
      %p231 = pneg %p230
      // Predicated region
      $region37: #{tpu_custom_call.1} parent=5 // pred_check
        _
      $region38: #{tpu_custom_call.1} parent=5 // pred_check_branch
        %233 = sbr.rel (%p230) target = $region40
      $region39: #{tpu_custom_call.1} parent=5 // pred_region
        %s234 = ssub.s32 %s14, 1
        %p235 = scmp.lt.s32.totalorder %s23, 1
        %s236 = scalar_select %p235, %s23, 1
        %s237 = smul.addr %s236, 8
        %s238 = scalar_lea.vmem %s0, %s237
        %p239 = pneg %p52
        %p240 = pneg %p49
        %p241 = scmp.lt.s32.totalorder %s24, 0
        %s242 = scalar_select %p241, %s24, 0
        %s243 = smul.addr %s242, 8
        %s244 = scalar_lea.vmem %s1, %s243
        %p245 = pneg %p78
        %p246 = pneg %p75
        %p247 = scmp.lt.s32.totalorder %s24, 0
        %s248 = scalar_select %p247, %s24, 0
        %s249 = scalar_lea.vmem %s2, %s248
        %p250 = pneg %p104
        %p251 = pneg %p101
        %s252 = smul.u32 16, %s24
        %p253 = scmp.lt.s32.totalorder %s252, 15
        %s254 = scalar_select %p253, %s252, 15
        %s255 = smul.addr %s254, 8
        %s256 = scalar_lea.vmem %s3, %s255
        %p257 = pneg %p130
        %p258 = pneg %p127
        %p259 = pneg %p151
        %p260 = pneg %p148
        %p261 = pneg %p177
        %p262 = pneg %p174
        %s263 = sand.u32 %s164, 1
        %s264 = scalar_lea.sflag [#allocation3], %s263
        %s265 = sand.u32 %s164, 1
        %s266 = smul.addr %s265, 8
        %s267 = scalar_lea.vmem [#allocation2], %s266
        %p268 = scmp.lt.s32.totalorder %s23, 1
        %s269 = scalar_select %p268, %s23, 1
        %s270 = smul.addr %s269, 8
        %s271 = scalar_lea.vmem %s0, %s270
        %p272 = scmp.lt.s32.totalorder %s24, 0
        %s273 = scalar_select %p272, %s24, 0
        %s274 = smul.addr %s273, 8
        %s275 = scalar_lea.vmem %s1, %s274
        %p276 = scmp.lt.s32.totalorder %s24, 0
        %s277 = scalar_select %p276, %s24, 0
        %s278 = scalar_lea.vmem %s2, %s277
        %s279 = smul.u32 16, %s24
        %p280 = scmp.lt.s32.totalorder %s279, 15
        %s281 = scalar_select %p280, %s279, 15
        %s282 = smul.addr %s281, 8
        %s283 = scalar_lea.vmem %s3, %s282
        %s284 = smul.u32 16, %s24
        %v285 = vld [vmem:[%s271] sm:$0xff]
        %v286 = vld [vmem:[%s275] sm:$0xff]
        %v287 = vld [vmem:[%s275 + $0x8] sm:$0xff]
        %v288 = vld [vmem:[%s275 + $0x10] sm:$0xff]
        %v289 = vld [vmem:[%s275 + $0x18] sm:$0xff]
        %v290 = vld [vmem:[%s278] sm:$0x1]
        %v292 = vlaneseq
        %v293 = vshrl.u32 %v292, 7
        %v294 = vsub.s32 0, %v293
        %v295 = vrot.slane %v290, %v294
        %vm297 = vcmask 261120
        %v299 = vsel %vm297, %v285, 0
        %301 = vmatprep.subr.mxu0 0.0
        %302 = vmatpush1.msra.mxu0 %v286
        %303 = vmatprep.subr.mxu0 0.0
        %304 = vmatpush1.msra.mxu0 %v287
        %305 = vmatprep.subr.mxu0 0.0
        %306 = vmatpush1.msra.mxu0 %v288
        %307 = vmatprep.subr.mxu0 0.0
        %308 = vmatpush1.msra.mxu0 %v289
        %309 = vmatprep.subr.mxu0 0.0
        %310 = vmatpush1.msra.mxu0 0.0
        %311 = vmatprep.subr.mxu0 0.0
        %312 = vmatpush1.msra.mxu0 0.0
        %313 = vmatprep.subr.mxu0 0.0
        %314 = vmatpush1.msra.mxu0 0.0
        %315 = vmatprep.subr.mxu0 0.0
        %316 = vmatpush1.msra.mxu0 0.0
        %317 = vmatprep.subr.mxu0 0.0
        %318 = vmatpush1.msra.mxu0 0.0
        %319 = vmatprep.subr.mxu0 0.0
        %320 = vmatpush1.msra.mxu0 0.0
        %321 = vmatprep.subr.mxu0 0.0
        %322 = vmatpush1.msra.mxu0 0.0
        %323 = vmatprep.subr.mxu0 0.0
        %324 = vmatpush1.msra.mxu0 0.0
        %325 = vmatprep.subr.mxu0 0.0
        %326 = vmatpush1.msra.mxu0 0.0
        %327 = vmatprep.subr.mxu0 0.0
        %328 = vmatpush1.msra.mxu0 0.0
        %329 = vmatprep.subr.mxu0 0.0
        %330 = vmatpush1.msra.mxu0 0.0
        %331 = vmatprep.subr.mxu0 0.0
        %332 = vmatpush1.msra.mxu0 0.0
        %333 = vmatprep.subr.mxu0 0.0
        %334 = vmatpush1.msra.mxu0 0.0
        %335 = vmatprep.subr.mxu0 0.0
        %336 = vmatpush1.msra.mxu0 0.0
        %337 = vmatprep.subr.mxu0 0.0
        %338 = vmatpush1.msra.mxu0 0.0
        %339 = vmatprep.subr.mxu0 0.0
        %340 = vmatpush1.msra.mxu0 0.0
        %341 = vmatprep.subr.mxu0 0.0
        %342 = vmatpush1.msra.mxu0 0.0
        %343 = vmatprep.subr.mxu0 0.0
        %344 = vmatpush1.msra.mxu0 0.0
        %345 = vmatprep.subr.mxu0 0.0
        %346 = vmatpush1.msra.mxu0 0.0
        %347 = vmatprep.subr.mxu0 0.0
        %348 = vmatpush1.msra.mxu0 0.0
        %349 = vmatprep.subr.mxu0 0.0
        %350 = vmatpush1.msra.mxu0 0.0
        %351 = vmatprep.subr.mxu0 0.0
        %352 = vmatpush1.msra.mxu0 0.0
        %353 = vmatprep.subr.mxu0 0.0
        %354 = vmatpush1.msra.mxu0 0.0
        %355 = vmatprep.subr.mxu0 0.0
        %356 = vmatpush1.msra.mxu0 0.0
        %357 = vmatprep.subr.mxu0 0.0
        %358 = vmatpush1.msra.mxu0 0.0
        %359 = vmatprep.subr.mxu0 0.0
        %360 = vmatpush1.msra.mxu0 0.0
        %361 = vmatprep.subr.mxu0 0.0
        %362 = vmatpush1.msra.mxu0 0.0
        %363 = vmatprep.subr.mxu0 0.0
        %364 = vmatpush1.msra.mxu0 0.0
        %365 = vmatprep.mubr.f32.mxu0 0.0
        %366 = vmatmul.mubr.f32.gmra.mrb[0].mxu0 %v299
        %v367 = vpop.f32.mrb[0].mxu0
        %v368 = vadd.f32 %v295, %v367
        %v369 = vpop.f32.mrb[0].mxu0
        %370 = vdwg.mxu0
        %v371 = vmax.f32 %v368, 0.0
        %v372 = vld [vmem:[%s283] sm:$0xff]
        %v373 = vld [vmem:[%s283 + $0x8] sm:$0xff]
        %v374 = vld [vmem:[%s283 + $0x10] sm:$0xff]
        %v375 = vld [vmem:[%s283 + $0x18] sm:$0xff]
        %v376 = vld [vmem:[%s283 + $0x20] sm:$0xff]
        %v377 = vld [vmem:[%s283 + $0x28] sm:$0xff]
        %v378 = vld [vmem:[%s283 + $0x30] sm:$0xff]
        %v379 = vld [vmem:[%s283 + $0x38] sm:$0xff]
        %v380 = vld [vmem:[%s283 + $0x40] sm:$0xff]
        %v381 = vld [vmem:[%s283 + $0x48] sm:$0xff]
        %v382 = vld [vmem:[%s283 + $0x50] sm:$0xff]
        %v383 = vld [vmem:[%s283 + $0x58] sm:$0xff]
        %v384 = vld [vmem:[%s283 + $0x60] sm:$0xff]
        %v385 = vld [vmem:[%s283 + $0x68] sm:$0xff]
        %v386 = vld [vmem:[%s283 + $0x70] sm:$0xff]
        %v387 = vld [vmem:[%s283 + $0x78] sm:$0xff]
        %v388 = vld [vmem:[%s4] sm:$0x1]
        %v390 = vlaneseq
        %v391 = vshrl.u32 %v390, 7
        %v392 = vsub.s32 0, %v391
        %v393 = vrot.slane %v388, %v392
        %395 = vmatprep.subr.mxu0 0.0
        %396 = vmatpush1.msra.mxu0 %v372
        %397 = vmatprep.subr.mxu0 0.0
        %398 = vmatpush1.msra.mxu0 %v373
        %399 = vmatprep.subr.mxu0 0.0
        %400 = vmatpush1.msra.mxu0 %v374
        %401 = vmatprep.subr.mxu0 0.0
        %402 = vmatpush1.msra.mxu0 %v375
        %403 = vmatprep.subr.mxu0 0.0
        %404 = vmatpush1.msra.mxu0 %v376
        %405 = vmatprep.subr.mxu0 0.0
        %406 = vmatpush1.msra.mxu0 %v377
        %407 = vmatprep.subr.mxu0 0.0
        %408 = vmatpush1.msra.mxu0 %v378
        %409 = vmatprep.subr.mxu0 0.0
        %410 = vmatpush1.msra.mxu0 %v379
        %411 = vmatprep.subr.mxu0 0.0
        %412 = vmatpush1.msra.mxu0 %v380
        %413 = vmatprep.subr.mxu0 0.0
        %414 = vmatpush1.msra.mxu0 %v381
        %415 = vmatprep.subr.mxu0 0.0
        %416 = vmatpush1.msra.mxu0 %v382
        %417 = vmatprep.subr.mxu0 0.0
        %418 = vmatpush1.msra.mxu0 %v383
        %419 = vmatprep.subr.mxu0 0.0
        %420 = vmatpush1.msra.mxu0 %v384
        %421 = vmatprep.subr.mxu0 0.0
        %422 = vmatpush1.msra.mxu0 %v385
        %423 = vmatprep.subr.mxu0 0.0
        %424 = vmatpush1.msra.mxu0 %v386
        %425 = vmatprep.subr.mxu0 0.0
        %426 = vmatpush1.msra.mxu0 %v387
        %427 = vmatprep.subr.mxu0 0.0
        %428 = vmatpush1.msra.mxu0 0.0
        %429 = vmatprep.subr.mxu0 0.0
        %430 = vmatpush1.msra.mxu0 0.0
        %431 = vmatprep.subr.mxu0 0.0
        %432 = vmatpush1.msra.mxu0 0.0
        %433 = vmatprep.subr.mxu0 0.0
        %434 = vmatpush1.msra.mxu0 0.0
        %435 = vmatprep.subr.mxu0 0.0
        %436 = vmatpush1.msra.mxu0 0.0
        %437 = vmatprep.subr.mxu0 0.0
        %438 = vmatpush1.msra.mxu0 0.0
        %439 = vmatprep.subr.mxu0 0.0
        %440 = vmatpush1.msra.mxu0 0.0
        %441 = vmatprep.subr.mxu0 0.0
        %442 = vmatpush1.msra.mxu0 0.0
        %443 = vmatprep.subr.mxu0 0.0
        %444 = vmatpush1.msra.mxu0 0.0
        %445 = vmatprep.subr.mxu0 0.0
        %446 = vmatpush1.msra.mxu0 0.0
        %447 = vmatprep.subr.mxu0 0.0
        %448 = vmatpush1.msra.mxu0 0.0
        %449 = vmatprep.subr.mxu0 0.0
        %450 = vmatpush1.msra.mxu0 0.0
        %451 = vmatprep.subr.mxu0 0.0
        %452 = vmatpush1.msra.mxu0 0.0
        %453 = vmatprep.subr.mxu0 0.0
        %454 = vmatpush1.msra.mxu0 0.0
        %455 = vmatprep.subr.mxu0 0.0
        %456 = vmatpush1.msra.mxu0 0.0
        %457 = vmatprep.subr.mxu0 0.0
        %458 = vmatpush1.msra.mxu0 0.0
        %459 = vmatprep.mubr.f32.mxu0 0.0
        %460 = vmatmul.mubr.f32.gmra.mrb[0].mxu0 %v371
        %v461 = vpop.f32.mrb[0].mxu0
        %v462 = vadd.f32 %v393, %v461
        %v463 = vpop.f32.mrb[0].mxu0
        %464 = vdwg.mxu0
        %465 = vst.msk [vmem:[%s267] sm:$0xff] %vm297, %v462
        %s466 = sand.u32 %s164, 1
        %s467 = scalar_lea.sflag [#allocation3], %s466
        %s468 = sand.u32 %s164, 1
        %s469 = smul.addr %s468, 8
        %s470 = scalar_lea.vmem [#allocation2], %s469
        // Predicated region
        $region41: #{tpu_custom_call.1} parent=39 // pred_check
          %p471 = pneg %p174
        $region42: #{tpu_custom_call.1} parent=39 // pred_check_branch
          %473 = sbr.rel (%p471) target = $region44
        $region43: #{tpu_custom_call.1} parent=39 // pred_region
          %s475 = ssub.s32 128, 128
          %476 = vsyncadd %s467, %s475
          %s477 = smul.addr %s23, 128
          %s478 = scalar_lea.hbm %s5, %s477
          %s480 = sshll.u32 %s470, 4
          %s481 = int_to_ptr.vmem [resolvable:$true] %s480
          %483 = dma.vmem_to_hbm [thread:$0]  %s481, 128, %s478, %s467
        $region44: #{tpu_custom_call.1} parent=39 // pred_fallthru
          _
      $region40: #{tpu_custom_call.1} parent=5 // pred_fallthru
        _
      %p484 = scmp.le.s32.totalorder 2, %s14
      // Predicated region
      $region45: #{tpu_custom_call.1} parent=5 // pred_check
        %p485 = pneg %p484
      $region46: #{tpu_custom_call.1} parent=5 // pred_check_branch
        %487 = sbr.rel (%p485) target = $region48
      $region47: #{tpu_custom_call.1} parent=5 // pred_region
        %s488 = ssub.s32 %s14, 2
        // Predicated region
        $region49: #{tpu_custom_call.1} parent=47 // pred_check
          %p489 = pneg %p180
        $region50: #{tpu_custom_call.1} parent=47 // pred_check_branch
          %491 = sbr.rel (%p489) target = $region52
        $region51: #{tpu_custom_call.1} parent=47 // pred_region
          %s492 = sand.u32 %s165, 1
          %s493 = scalar_lea.sflag [#allocation3], %s492
          %s494 = sand.u32 %s165, 1
          %s495 = smul.addr %s494, 8
          %s496 = scalar_lea.vmem [#allocation2], %s495
          %497 = dma.done %s493, 128
        $region52: #{tpu_custom_call.1} parent=47 // pred_fallthru
          _
      $region48: #{tpu_custom_call.1} parent=5 // pred_fallthru
        _
    $region6: #{tpu_custom_call.1} parent=1 // loop_footer
      %s18 = sadd.s32 1, %s14
    $region7: #{tpu_custom_call.1} parent=1 // loop_footer_branch
      %13 = sbr.rel target = $region3
    $region8: #{tpu_custom_call.1} parent=1 // loop_exit
      _
    %498 = vsyncpa [#allocation3], 1
    %s499 = scalar_lea.sflag [#allocation3], 1
    %500 = vsyncpa %s499, 1

</llo_original>
